<compile_context>
chip_gen: v7x
topology: tpu7x:2x2x1
jax: 0.10.0
libtpu: 0.0.40
codegen_flags: <defaults>
</compile_context>

<pallas_src>
import jax
import jax.numpy as jnp
from jax.experimental import pallas as pl
from jax.experimental.pallas import tpu as pltpu


def _gaussian_rbf_kernel(x_ref, b_ref, o_ref):
    # x_ref: (tb, td) tile; b_ref: (1, td) tile, broadcast over rows on the VPU.
    neg_pi = jnp.asarray(-jnp.pi, dtype=x_ref.dtype)
    diff = x_ref[...] - b_ref[...]
    o_ref[...] = jnp.exp((diff * diff) * neg_pi).astype(o_ref.dtype)


def _vmem_limit_bytes() -> int:
    """Scoped VMEM limit to request: ~3/4 of this chip's physical VMEM."""
    try:
        cap = int(pltpu.get_tpu_info().vmem_capacity_bytes)
    except Exception:
        cap = 64 * 1024 * 1024  # conservative (v7x-sized) fallback
    return max(16 * 1024 * 1024, (cap * 3) // 4)


def _choose_tiles(bp: int, dp: int, itemsize: int, tile_budget_bytes: int):
    # Feature tile: keep full extent unless D is huge and 128-aligned, in which case
    # cap at a lane-dense 2048 so tile size no longer scales with D.
    if dp % 128 == 0 and dp > 2048:
        td = 2048
    else:
        td = dp
    # Batch tile: ~4 live (tb, td) buffers (double-buffered x in + out) must fit.
    max_tb = max(1, tile_budget_bytes // (4 * td * itemsize))
    tb = min(bp, max_tb, 2048)
    if tb >= bp:
        tb = bp                  # full extent is always a legal block shape
    elif tb >= 8:
        tb = (tb // 8) * 8       # sublane-aligned multiple of 8
    else:
        tb = min(8, bp)
    return tb, td


def _gaussian_rbf_2d(x2d, b2d, *, tb, td, vmem_limit):
    bp, dp = x2d.shape
    grid = (pl.cdiv(bp, tb), pl.cdiv(dp, td))
    return pl.pallas_call(
        _gaussian_rbf_kernel,
        out_shape=jax.ShapeDtypeStruct((bp, dp), x2d.dtype),
        grid_spec=pltpu.PrefetchScalarGridSpec(
            num_scalar_prefetch=0,
            grid=grid,
            in_specs=[
                pl.BlockSpec((tb, td), lambda i, j: (i, j)),
                pl.BlockSpec((1, td), lambda i, j: (0, j)),
            ],
            out_specs=pl.BlockSpec((tb, td), lambda i, j: (i, j)),
        ),
        compiler_params=pltpu.CompilerParams(
            dimension_semantics=("parallel", "parallel"),
            vmem_limit_bytes=vmem_limit,
        ),
    )(x2d, b2d)


def gaussian_rbf(x: jax.Array, b: jax.Array) -> jax.Array:
    """x: (..., D), b: (D,) -> exp(-pi * (x - b)**2), same shape as x."""
    orig_shape = x.shape
    D = orig_shape[-1]
    assert b.shape == (D,)
    x2 = x.reshape(-1, D)
    B = x2.shape[0]

    itemsize = jnp.dtype(x.dtype).itemsize
    vmem_limit = _vmem_limit_bytes()
    tile_budget = vmem_limit // 2

    # Lane-dense repack: if D is a small divisor of 128, pack r = 128/D batch rows
    # into one lane row so every load/store uses all 128 lanes (e.g. D=32 -> r=4).
    r = 128 // D if (D < 128 and 128 % D == 0) else 1
    if r > 1 and B % r == 0:
        xp = x2.reshape(B // r, r * D)
        b2 = jnp.tile(b, r).reshape(1, r * D)   # tiled (not broadcast) so each packed
    else:                                        # group sees the correct per-feature b
        r = 1
        xp = x2
        b2 = b.reshape(1, D)

    Bp, Dp = xp.shape
    tb, td = _choose_tiles(Bp, Dp, itemsize, tile_budget)
    out = _gaussian_rbf_2d(xp, b2, tb=tb, td=td, vmem_limit=vmem_limit)
    return out.reshape(orig_shape)


if __name__ == "__main__":
    key = jax.random.PRNGKey(0)
    k_x, k_b = jax.random.split(key)

    batch, input_dim = 8, 32
    x = jax.random.normal(k_x, (batch, input_dim), dtype=jnp.float32)
    # Deterministic parameter init (stands in for torch.randn(input_dim)).
    b = jax.random.normal(k_b, (input_dim,), dtype=jnp.float32)

    out = jax.block_until_ready(gaussian_rbf(x, b))

    # Pure-JAX reference check.
    ref = jnp.exp(-jnp.pi * (x - b[None, :]) ** 2)
    assert out.shape == (batch, input_dim)
    assert jnp.allclose(out, ref, atol=1e-6, rtol=1e-5)

    print("KERNEL_OK")
</pallas_src>

<mosaic_0001>
module attributes {stable_mosaic.version = 11 : i64} {
  func.func @_gaussian_rbf_kernel(%arg0: i32, %arg1: i32, %arg2: memref<2x128xf32, #tpu.memory_space<vmem>>, %arg3: memref<1x128xf32, #tpu.memory_space<vmem>>, %arg4: memref<2x128xf32, #tpu.memory_space<vmem>>) attributes {dimension_semantics = [#tpu.dimension_semantics<parallel>, #tpu.dimension_semantics<parallel>], iteration_bounds = array<i64: 1, 1>, scalar_prefetch = 0 : i64, scratch_operands = 0 : i64, tpu.core_type = #tpu.core_type<tc>, window_params = [{transform_indices = @transform_0, window_bounds = array<i64: 2, 128>}, {transform_indices = @transform_1, window_bounds = array<i64: 1, 128>}, {transform_indices = @transform_2, window_bounds = array<i64: 2, 128>}]} {
    %c0 = arith.constant 0 : index
    %c0_0 = arith.constant 0 : index
    %0 = vector.load %arg2[%c0, %c0_0] : memref<2x128xf32, #tpu.memory_space<vmem>>, vector<2x128xf32>
    %c0_1 = arith.constant 0 : index
    %c0_2 = arith.constant 0 : index
    %1 = vector.load %arg3[%c0_1, %c0_2] : memref<1x128xf32, #tpu.memory_space<vmem>>, vector<1x128xf32>
    %2 = vector.broadcast %1 : vector<1x128xf32> to vector<2x128xf32>
    %3 = arith.subf %0, %2 : vector<2x128xf32>
    %4 = arith.mulf %3, %3 : vector<2x128xf32>
    %cst = arith.constant -3.14159274 : f32
    %5 = vector.broadcast %cst : f32 to vector<2x128xf32>
    %6 = arith.mulf %4, %5 : vector<2x128xf32>
    %7 = math.exp %6 : vector<2x128xf32>
    %c0_3 = arith.constant 0 : index
    %c0_4 = arith.constant 0 : index
    %8 = vector.load %arg4[%c0_3, %c0_4] : memref<2x128xf32, #tpu.memory_space<vmem>>, vector<2x128xf32>
    tpu.vector_store %arg4[%c0_3, %c0_4], %7 {strides = array<i32>} : memref<2x128xf32, #tpu.memory_space<vmem>>, vector<2x128xf32>,
    return
  }
  func.func @transform_0(%arg0: i32, %arg1: i32) -> (i32, i32) {
    %c0_i32 = arith.constant 0 : i32
    return %arg0, %arg1 : i32, i32
  }
  func.func @transform_1(%arg0: i32, %arg1: i32) -> (i32, i32) {
    %c0_i32 = arith.constant 0 : i32
    %c0_i32_0 = arith.constant 0 : i32
    return %c0_i32, %arg1 : i32, i32
  }
  func.func @transform_2(%arg0: i32, %arg1: i32) -> (i32, i32) {
    %c0_i32 = arith.constant 0 : i32
    return %arg0, %arg1 : i32, i32
  }
}

</mosaic_0001>

<llo_original>
// kernel: tpu_custom_call.1
$region0: #{tpu_custom_call.1}
  #allocation0 [shape = 'u32[]', space=smem, size = 0x4, offset = 0x4, fixed_abs, tag = 'smem constant byte address 0x4 - core index']
  #allocation1 [shape = 'u32[144,128]{1,0:T(1,128)}', space=vmem, size = 0x12000, scoped, tag = 'internal scratch']
  %s0 = inlined_call_operand.hbm [shape: f32[2,128], index: 0, kind: input, shape index: {}]
  %s1 = inlined_call_operand.vmem [shape: f32[1,128], index: 1, kind: input, shape index: {}]
  %s2 = inlined_call_operand.hbm [shape: f32[2,128], index: 2, kind: output, shape index: {}]
  %s3 = sld [smem:[#allocation0]]
  $region22: #{tpu_custom_call.1} parent=0
    _
  %s5 = ssub.s32 1, %s3
  %s6 = scalar_select 0, %s5, %s3
  $region1: #{tpu_custom_call.1} parent=0
    #allocation2 [shape = 'u8[1024]{0}', space=vmem, size = 0x400, scoped, tag = 'input window, operand 0, single buffered']
    #allocation3 [shape = 's32[1]{0}', space=sflag, size = 0x4, scoped, tag = 'scoped memory for tpu_custom_call.1']
    #allocation4 [shape = 's32[1]{0}', space=sflag, size = 0x4, scoped, tag = 'scoped memory for tpu_custom_call.1']
    #allocation5 [shape = 'u8[1024]{0}', space=vmem, size = 0x400, scoped, tag = 'output window, operand 0, single buffered']
    %7 = vsyncpa [#allocation3], 0
    %8 = vsyncpa [#allocation4], 0
    // Predicated region
    $region2: #{tpu_custom_call.1} parent=1 // pred_check
      _
    $region3: #{tpu_custom_call.1} parent=1 // pred_check_branch
      %10 = sbr.rel (0) target = $region5
    $region4: #{tpu_custom_call.1} parent=1 // pred_region
      %s12 = ssub.s32 32, 32
      %13 = vsyncadd [#allocation3], %s12
      %s15 = sshll.u32 [#allocation2], 4
      %s16 = int_to_ptr.vmem [resolvable:$true] %s15
      %18 = dma.hbm_to_vmem [thread:$0]  %s0, 32, %s16, [#allocation3]
    $region5: #{tpu_custom_call.1} parent=1 // pred_fallthru
      _
    // Predicated region
    $region6: #{tpu_custom_call.1} parent=1 // pred_check
      _
    $region7: #{tpu_custom_call.1} parent=1 // pred_check_branch
      %20 = sbr.rel (0) target = $region9
    $region8: #{tpu_custom_call.1} parent=1 // pred_region
      _
    $region9: #{tpu_custom_call.1} parent=1 // pred_fallthru
      _
    // Predicated region
    $region10: #{tpu_custom_call.1} parent=1 // pred_check
      _
    $region11: #{tpu_custom_call.1} parent=1 // pred_check_branch
      %22 = sbr.rel (0) target = $region13
    $region12: #{tpu_custom_call.1} parent=1 // pred_region
      %23 = dma.done [#allocation3], 32
    $region13: #{tpu_custom_call.1} parent=1 // pred_fallthru
      _
    %v24 = vld [vmem:[#allocation2] sm:$0x3]
    %v25 = vld [vmem:[%s1] sm:$0x1]
    %v27 = vlaneseq
    %v28 = vshrl.u32 %v27, 7
    %v29 = vsub.s32 0, %v28
    %v30 = vrot.slane %v25, %v29
    %v32 = vsub.f32 %v24, %v30
    %v33 = vmul.f32 %v32, %v32
    %v34 = vmul.f32 %v33, -3.1415927
    %v35 = vmul.f32 %v34, 1.442695
    %v36 = vpow.pop %v35
    %37 = vst [vmem:[#allocation5] sm:$0x3] %v36
    // Predicated region
    $region14: #{tpu_custom_call.1} parent=1 // pred_check
      _
    $region15: #{tpu_custom_call.1} parent=1 // pred_check_branch
      %39 = sbr.rel (0) target = $region17
    $region16: #{tpu_custom_call.1} parent=1 // pred_region
      %s41 = ssub.s32 32, 32
      %42 = vsyncadd [#allocation4], %s41
      %s44 = sshll.u32 [#allocation5], 4
      %s45 = int_to_ptr.vmem [resolvable:$true] %s44
      %47 = dma.vmem_to_hbm [thread:$0]  %s45, 32, %s2, [#allocation4]
    $region17: #{tpu_custom_call.1} parent=1 // pred_fallthru
      _
    // Predicated region
    $region18: #{tpu_custom_call.1} parent=1 // pred_check
      _
    $region19: #{tpu_custom_call.1} parent=1 // pred_check_branch
      %49 = sbr.rel (0) target = $region21
    $region20: #{tpu_custom_call.1} parent=1 // pred_region
      %50 = dma.done [#allocation4], 32
    $region21: #{tpu_custom_call.1} parent=1 // pred_fallthru
      _
    %51 = vsyncpa [#allocation3], 1
    %52 = vsyncpa [#allocation4], 1

</llo_original>
